<compile_context>
chip_gen: v6e
topology: v6e:2x2x1
jax: 0.10.0
libtpu: 0.0.40
codegen_flags: <defaults>
</compile_context>

<pallas_src>
import jax
import jax.numpy as jnp
import numpy as np
from jax.experimental import pallas as pl
from jax.experimental.pallas import tpu as pltpu


def _copy_kernel(x_ref, o_ref):
    # Pure VMEM tile copy; with aliasing + donation this is an in-place round trip.
    o_ref[...] = x_ref[...]


def _pick_tile_rows(rows, row_bytes, max_tile_bytes=4 << 20):
    """Largest multiple-of-8 row tile within the byte budget (cdiv grid handles
    the partial last block, so the tile does not need to divide `rows`)."""
    budget_rows = (max_tile_bytes // max(row_bytes, 1)) // 8 * 8
    budget_rows = max(budget_rows, 8)
    if rows <= budget_rows:
        return rows  # single full-extent block (always a legal block shape)
    return budget_rows


def _identity_copy_kernel(x):
    """Pallas copy kernel, used only for parity testing (force_kernel=True)."""
    n, f = x.shape
    total = n * f
    itemsize = jnp.dtype(x.dtype).itemsize

    # Lane-dense view: if the feature dim is not a multiple of 128 lanes but the
    # total element count tiles cleanly into 128-wide rows, copy a (*, 128) slab
    # instead (row-major bitcast; avoids masked partial stores).
    if f % 128 != 0 and total % 128 == 0:
        rows, cols = total // 128, 128
    else:
        rows, cols = n, f

    tile_rows = _pick_tile_rows(rows, cols * itemsize)
    grid = (pl.cdiv(rows, tile_rows),)

    x2 = x.reshape(rows, cols)
    out2 = pl.pallas_call(
        _copy_kernel,
        out_shape=jax.ShapeDtypeStruct((rows, cols), x.dtype),
        grid=grid,
        in_specs=[pl.BlockSpec((tile_rows, cols), lambda i: (i, 0))],
        out_specs=pl.BlockSpec((tile_rows, cols), lambda i: (i, 0)),
        # Alias input 0 -> output 0: no second HBM allocation; fully in-place
        # if the caller donates x (jit donate_argnums).
        input_output_aliases={0: 0},
        compiler_params=pltpu.CompilerParams(
            dimension_semantics=("parallel",),
            vmem_limit_bytes=32 << 20,
        ),
    )(x2)
    return out2.reshape(n, f)


def identical_pool(x, batch=None, *, force_kernel=False):
    """Pallas equivalent of IdenticalPool.forward(x, batch) -> x.

    The identity has no compute; the fastest correct implementation on every
    TPU generation is to return x without touching HBM.  Set force_kernel=True
    to route through the Pallas copy kernel (parity / testing only).
    """
    del batch  # unused, as in the PyTorch module
    if not force_kernel:
        return x
    return _identity_copy_kernel(x)


if __name__ == "__main__":
    key = jax.random.PRNGKey(0)
    k1, _ = jax.random.split(key)
    # Small GNN-like shapes: 16 nodes, 32 hidden features, 2 graphs in the batch.
    x = jax.random.normal(k1, (16, 32), dtype=jnp.float32)
    batch = jnp.repeat(jnp.arange(2, dtype=jnp.int32), 8)  # graph id per node

    # Fast path (what production code should use): zero-cost identity.
    out_fast = identical_pool(x, batch)
    out_fast = jax.block_until_ready(out_fast)
    np.testing.assert_array_equal(np.asarray(out_fast), np.asarray(x))

    # Parity path: run the Pallas kernel once to validate it on TPU.
    out_kernel = identical_pool(x, batch, force_kernel=True)
    out_kernel = jax.block_until_ready(out_kernel)
    assert out_kernel.shape == x.shape and out_kernel.dtype == x.dtype
    np.testing.assert_array_equal(np.asarray(out_kernel), np.asarray(x))

    print("KERNEL_OK")
</pallas_src>

<mosaic_0001>
module attributes {stable_mosaic.version = 11 : i64} {
  func.func @_copy_kernel(%arg0: i32, %arg1: memref<4x128xf32, #tpu.memory_space<vmem>>, %arg2: memref<4x128xf32, #tpu.memory_space<vmem>>) attributes {dimension_semantics = [#tpu.dimension_semantics<parallel>], iteration_bounds = array<i64: 1>, scalar_prefetch = 0 : i64, scratch_operands = 0 : i64, tpu.core_type = #tpu.core_type<tc>, window_params = [{transform_indices = @transform_0, window_bounds = array<i64: 4, 128>}, {transform_indices = @transform_1, window_bounds = array<i64: 4, 128>}]} {
    %c0 = arith.constant 0 : index
    %c0_0 = arith.constant 0 : index
    %0 = vector.load %arg1[%c0, %c0_0] : memref<4x128xf32, #tpu.memory_space<vmem>>, vector<4x128xf32>
    %c0_1 = arith.constant 0 : index
    %c0_2 = arith.constant 0 : index
    %1 = vector.load %arg2[%c0_1, %c0_2] : memref<4x128xf32, #tpu.memory_space<vmem>>, vector<4x128xf32>
    tpu.vector_store %arg2[%c0_1, %c0_2], %0 {strides = array<i32>} : memref<4x128xf32, #tpu.memory_space<vmem>>, vector<4x128xf32>,
    return
  }
  func.func @transform_0(%arg0: i32) -> (i32, i32) {
    %c0_i32 = arith.constant 0 : i32
    %c0_i32_0 = arith.constant 0 : i32
    return %arg0, %c0_i32 : i32, i32
  }
  func.func @transform_1(%arg0: i32) -> (i32, i32) {
    %c0_i32 = arith.constant 0 : i32
    %c0_i32_0 = arith.constant 0 : i32
    return %arg0, %c0_i32 : i32, i32
  }
}

</mosaic_0001>

<llo_original>
// kernel: tpu_custom_call.1
$region0: #{tpu_custom_call.1}
  #allocation0 [shape = 'u32[]', space=smem, size = 0x4, offset = 0x4, fixed_abs, tag = 'smem constant byte address 0x4 - core index']
  #allocation1 [shape = 'u32[144,128]{1,0:T(1,128)}', space=vmem, size = 0x12000, scoped, tag = 'internal scratch']
  %s0 = inlined_call_operand.hbm [shape: f32[4,128], index: 0, kind: input, shape index: {}, may-alias: {0,1}]
  %s1 = inlined_call_operand.hbm [shape: f32[4,128], index: 1, kind: output, shape index: {}, may-alias: {0,1}]
  %s2 = sld [smem:[#allocation0]]
  $region18: #{tpu_custom_call.1} parent=0
    _
  %s4 = ssub.s32 1, %s2
  %s5 = scalar_select 0, %s4, %s2
  $region1: #{tpu_custom_call.1} parent=0
    #allocation2 [shape = 'u8[2048]{0}', space=vmem, size = 0x800, scoped, tag = 'input window, operand 0, single buffered']
    #allocation3 [shape = 's32[1]{0}', space=sflag, size = 0x4, scoped, tag = 'scoped memory for tpu_custom_call.1']
    #allocation4 [shape = 's32[1]{0}', space=sflag, size = 0x4, scoped, tag = 'scoped memory for tpu_custom_call.1']
    #allocation5 [shape = 'u8[2048]{0}', space=vmem, size = 0x800, scoped, tag = 'output window, operand 0, single buffered']
    %6 = vsyncpa [#allocation3], 0
    %7 = vsyncpa [#allocation4], 0
    // Predicated region
    $region2: #{tpu_custom_call.1} parent=1 // pred_check
      _
    $region3: #{tpu_custom_call.1} parent=1 // pred_check_branch
      %9 = sbr.rel (0) target = $region5
    $region4: #{tpu_custom_call.1} parent=1 // pred_region
      %s11 = ssub.s32 64, 64
      %12 = vsyncadd [#allocation3], %s11
      %s14 = sshll.u32 [#allocation2], 4
      %s15 = int_to_ptr.vmem [resolvable:$true] %s14
      %17 = dma.hbm_to_vmem [thread:$0]  %s0, 64, %s15, [#allocation3]
    $region5: #{tpu_custom_call.1} parent=1 // pred_fallthru
      _
    // Predicated region
    $region6: #{tpu_custom_call.1} parent=1 // pred_check
      _
    $region7: #{tpu_custom_call.1} parent=1 // pred_check_branch
      %19 = sbr.rel (0) target = $region9
    $region8: #{tpu_custom_call.1} parent=1 // pred_region
      %20 = dma.done [#allocation3], 64
    $region9: #{tpu_custom_call.1} parent=1 // pred_fallthru
      _
    %v21 = vld [vmem:[#allocation2] sm:$0xf]
    %22 = vst [vmem:[#allocation5] sm:$0xf] %v21
    // Predicated region
    $region10: #{tpu_custom_call.1} parent=1 // pred_check
      _
    $region11: #{tpu_custom_call.1} parent=1 // pred_check_branch
      %24 = sbr.rel (0) target = $region13
    $region12: #{tpu_custom_call.1} parent=1 // pred_region
      %s26 = ssub.s32 64, 64
      %27 = vsyncadd [#allocation4], %s26
      %s29 = sshll.u32 [#allocation5], 4
      %s30 = int_to_ptr.vmem [resolvable:$true] %s29
      %32 = dma.vmem_to_hbm [thread:$0]  %s30, 64, %s1, [#allocation4]
    $region13: #{tpu_custom_call.1} parent=1 // pred_fallthru
      _
    // Predicated region
    $region14: #{tpu_custom_call.1} parent=1 // pred_check
      _
    $region15: #{tpu_custom_call.1} parent=1 // pred_check_branch
      %34 = sbr.rel (0) target = $region17
    $region16: #{tpu_custom_call.1} parent=1 // pred_region
      %35 = dma.done [#allocation4], 64
    $region17: #{tpu_custom_call.1} parent=1 // pred_fallthru
      _
    %36 = vsyncpa [#allocation3], 1
    %37 = vsyncpa [#allocation4], 1

</llo_original>
